<compile_context>
chip_gen: v7x
topology: tpu7x:2x2x1
jax: 0.10.0
libtpu: 0.0.40
codegen_flags: <defaults>
</compile_context>

<pallas_src>
import jax
import jax.numpy as jnp
from jax import lax
from jax.experimental import pallas as pl
from jax.experimental.pallas import tpu as pltpu


def cbow_kernel(tok_ref, w_ref, emb_ref, lin_ref, o_ref):
    # tok_ref: VMEM [B, C] int32   token indices
    # w_ref:   SMEM [C]    f32     per-context-word scalar weights
    # emb_ref: VMEM [V, D] bf16    embedding table
    # lin_ref: VMEM [D, V] bf16    output projection, pre-transposed to [K, N]
    # o_ref:   VMEM [B, V] f32     logits
    B, V = o_ref.shape
    C = tok_ref.shape[1]

    # Weighted one-hot "scatter" matrix: S[b, v] = sum_c w[c] * (tok[b,c] == v).
    # Built in f32 on the VPU (C=6 unrolled full-vreg passes; no dynamic VMEM
    # indexing, no XLU work). Static column slices of the token tile.
    vocab_iota = lax.broadcasted_iota(jnp.int32, (B, V), 1)
    s = jnp.zeros((B, V), jnp.float32)
    for c in range(C):
        tok_c = tok_ref[:, c:c + 1]                       # [B, 1] int32
        s = s + jnp.where(tok_c == vocab_iota, w_ref[c], 0.0)

    # Fused embedding gather + weighted context reduction as one MXU pass:
    # u[b, d] = sum_c w[c] * E[tok[b, c], d].  f32 accumulation; u stays in
    # registers (no VMEM scratch round trip).
    u = jnp.dot(s.astype(jnp.bfloat16), emb_ref[...],
                preferred_element_type=jnp.float32)        # [B, D]

    # Output projection: canonical [M, K] x [K, N] (lin pre-transposed), bf16
    # operands with f32 accumulation, lane-dense [B, V] store.
    z = jnp.dot(u.astype(jnp.bfloat16), lin_ref[...],
                preferred_element_type=jnp.float32)        # [B, V]
    o_ref[...] = z.astype(o_ref.dtype)


def prepare_params(emb_table, ctx_weights, lin_weight):
    """One-time parameter prep (casts/transposes hoisted out of the per-call path)."""
    C = ctx_weights.size
    w_flat = jnp.reshape(ctx_weights, (C,)).astype(jnp.float32)   # [1,C,1] -> (C,)
    emb_bf16 = emb_table.astype(jnp.bfloat16)                     # [V, D]
    lin_t_bf16 = lin_weight.T.astype(jnp.bfloat16)                # [D, V] (canonical K,N)
    return w_flat, emb_bf16, lin_t_bf16


def cbow_forward(tokens, w_flat, emb_bf16, lin_t_bf16):
    """tokens: [B, C] int32; returns logits [B, V] float32."""
    B, C = tokens.shape
    V, D = emb_bf16.shape

    cost = pl.CostEstimate(
        flops=2 * B * V * D        # S @ E
        + 2 * B * D * V            # u @ lin^T
        + B * C * V,               # one-hot build (compare+select+add)
        transcendentals=0,
        bytes_accessed=V * D * 2 + D * V * 2 + B * V * 4 + B * C * 4 + C * 4,
    )

    return pl.pallas_call(
        cbow_kernel,
        out_shape=jax.ShapeDtypeStruct((B, V), jnp.float32),
        in_specs=[
            pl.BlockSpec(memory_space=pltpu.MemorySpace.VMEM),   # tokens
            pl.BlockSpec(memory_space=pltpu.MemorySpace.SMEM),   # ctx weights (scalars)
            pl.BlockSpec(memory_space=pltpu.MemorySpace.VMEM),   # emb table (bf16)
            pl.BlockSpec(memory_space=pltpu.MemorySpace.VMEM),   # lin weight^T (bf16)
        ],
        out_specs=pl.BlockSpec(memory_space=pltpu.MemorySpace.VMEM),
        cost_estimate=cost,
    )(tokens, w_flat, emb_bf16, lin_t_bf16)


if __name__ == "__main__":
    # Small, module-consistent shapes.
    num_embeddings = 256      # V (vocab)
    embedding_dim = 128       # D
    num_context_words = 6     # C
    batch = 8                 # B

    key = jax.random.PRNGKey(0)
    k_emb, k_lin, k_tok = jax.random.split(key, 3)

    # Deterministic parameter init (mirrors shapes from __init__):
    #   nn.Embedding(V, D) weight; row 0 replaced by sum(rows 1:)/V as in the module.
    emb_table = jax.random.normal(k_emb, (num_embeddings, embedding_dim), jnp.float32)
    emb_table = emb_table.at[0].set(emb_table[1:].sum(axis=0) / num_embeddings)
    #   nn.Linear(D, V, bias=False) weight: [V, D].
    bound = 1.0 / (embedding_dim ** 0.5)
    lin_weight = jax.random.uniform(
        k_lin, (num_embeddings, embedding_dim), jnp.float32, -bound, bound)
    #   self.weights = ones(C).unsqueeze(0).unsqueeze(2) -> [1, C, 1]  (vector=None)
    ctx_weights = jnp.ones((1, num_context_words, 1), jnp.float32)

    # Example input: [B, C] token indices.
    tokens = jax.random.randint(k_tok, (batch, num_context_words), 0, num_embeddings,
                                dtype=jnp.int32)

    # Hoisted once; reuse across forward calls (bf16 casts / transpose not re-run).
    w_flat, emb_bf16, lin_t_bf16 = prepare_params(emb_table, ctx_weights, lin_weight)

    z = cbow_forward(tokens, w_flat, emb_bf16, lin_t_bf16)
    z = jax.block_until_ready(z)

    # Pure-JAX f32 reference of the forward semantics.  Kernel uses bf16
    # embedding + projection operands (f32 accumulation), so tolerance
    # reflects bf16 input rounding on both matmuls.
    e_ref = jnp.take(emb_table, tokens, axis=0)
    u_ref = jnp.sum(e_ref * ctx_weights, axis=1)
    z_ref = u_ref @ lin_weight.T
    assert z.shape == (batch, num_embeddings)
    assert jnp.allclose(z, z_ref, atol=1e-1, rtol=2e-2)

    print("KERNEL_OK")
</pallas_src>

<mosaic_0001>
module attributes {stable_mosaic.version = 11 : i64} {
  func.func @cbow_kernel(%arg0: memref<8x6xi32, #tpu.memory_space<vmem>>, %arg1: memref<6xf32, #tpu.memory_space<smem>>, %arg2: memref<256x128xbf16, #tpu.memory_space<vmem>>, %arg3: memref<128x256xbf16, #tpu.memory_space<vmem>>, %arg4: memref<8x256xf32, #tpu.memory_space<vmem>>) attributes {dimension_semantics = [], scalar_prefetch = 0 : i64, scratch_operands = 0 : i64, tpu.core_type = #tpu.core_type<tc>} {
    %0 = tpu.iota {dimensions = array<i32: 1>} : vector<8x256xi32>
    %cst = arith.constant 0.000000e+00 : f32
    %1 = vector.broadcast %cst : f32 to vector<8x256xf32>
    %c0 = arith.constant 0 : index
    %c0_0 = arith.constant 0 : index
    %2 = vector.load %arg0[%c0, %c0_0] : memref<8x6xi32, #tpu.memory_space<vmem>>, vector<8x1xi32>
    %3 = vector.broadcast %2 : vector<8x1xi32> to vector<8x256xi32>
    %4 = arith.cmpi eq, %3, %0 : vector<8x256xi32>
    %c0_1 = arith.constant 0 : index
    %5 = memref.load %arg1[%c0_1] : memref<6xf32, #tpu.memory_space<smem>>
    %cst_2 = arith.constant 0.000000e+00 : f32
    %6 = vector.broadcast %5 : f32 to vector<8x256xf32>
    %7 = vector.broadcast %cst_2 : f32 to vector<8x256xf32>
    %8 = arith.select %4, %6, %7 : vector<8x256xi1>, vector<8x256xf32>
    %9 = arith.addf %1, %8 : vector<8x256xf32>
    %c0_3 = arith.constant 0 : index
    %c1 = arith.constant 1 : index
    %10 = vector.load %arg0[%c0_3, %c1] : memref<8x6xi32, #tpu.memory_space<vmem>>, vector<8x1xi32>
    %11 = vector.broadcast %10 : vector<8x1xi32> to vector<8x256xi32>
    %12 = arith.cmpi eq, %11, %0 : vector<8x256xi32>
    %c1_4 = arith.constant 1 : index
    %13 = memref.load %arg1[%c1_4] : memref<6xf32, #tpu.memory_space<smem>>
    %cst_5 = arith.constant 0.000000e+00 : f32
    %14 = vector.broadcast %13 : f32 to vector<8x256xf32>
    %15 = vector.broadcast %cst_5 : f32 to vector<8x256xf32>
    %16 = arith.select %12, %14, %15 : vector<8x256xi1>, vector<8x256xf32>
    %17 = arith.addf %9, %16 : vector<8x256xf32>
    %c0_6 = arith.constant 0 : index
    %c2 = arith.constant 2 : index
    %18 = vector.load %arg0[%c0_6, %c2] : memref<8x6xi32, #tpu.memory_space<vmem>>, vector<8x1xi32>
    %19 = vector.broadcast %18 : vector<8x1xi32> to vector<8x256xi32>
    %20 = arith.cmpi eq, %19, %0 : vector<8x256xi32>
    %c2_7 = arith.constant 2 : index
    %21 = memref.load %arg1[%c2_7] : memref<6xf32, #tpu.memory_space<smem>>
    %cst_8 = arith.constant 0.000000e+00 : f32
    %22 = vector.broadcast %21 : f32 to vector<8x256xf32>
    %23 = vector.broadcast %cst_8 : f32 to vector<8x256xf32>
    %24 = arith.select %20, %22, %23 : vector<8x256xi1>, vector<8x256xf32>
    %25 = arith.addf %17, %24 : vector<8x256xf32>
    %c0_9 = arith.constant 0 : index
    %c3 = arith.constant 3 : index
    %26 = vector.load %arg0[%c0_9, %c3] : memref<8x6xi32, #tpu.memory_space<vmem>>, vector<8x1xi32>
    %27 = vector.broadcast %26 : vector<8x1xi32> to vector<8x256xi32>
    %28 = arith.cmpi eq, %27, %0 : vector<8x256xi32>
    %c3_10 = arith.constant 3 : index
    %29 = memref.load %arg1[%c3_10] : memref<6xf32, #tpu.memory_space<smem>>
    %cst_11 = arith.constant 0.000000e+00 : f32
    %30 = vector.broadcast %29 : f32 to vector<8x256xf32>
    %31 = vector.broadcast %cst_11 : f32 to vector<8x256xf32>
    %32 = arith.select %28, %30, %31 : vector<8x256xi1>, vector<8x256xf32>
    %33 = arith.addf %25, %32 : vector<8x256xf32>
    %c0_12 = arith.constant 0 : index
    %c4 = arith.constant 4 : index
    %34 = vector.load %arg0[%c0_12, %c4] : memref<8x6xi32, #tpu.memory_space<vmem>>, vector<8x1xi32>
    %35 = vector.broadcast %34 : vector<8x1xi32> to vector<8x256xi32>
    %36 = arith.cmpi eq, %35, %0 : vector<8x256xi32>
    %c4_13 = arith.constant 4 : index
    %37 = memref.load %arg1[%c4_13] : memref<6xf32, #tpu.memory_space<smem>>
    %cst_14 = arith.constant 0.000000e+00 : f32
    %38 = vector.broadcast %37 : f32 to vector<8x256xf32>
    %39 = vector.broadcast %cst_14 : f32 to vector<8x256xf32>
    %40 = arith.select %36, %38, %39 : vector<8x256xi1>, vector<8x256xf32>
    %41 = arith.addf %33, %40 : vector<8x256xf32>
    %c0_15 = arith.constant 0 : index
    %c5 = arith.constant 5 : index
    %42 = vector.load %arg0[%c0_15, %c5] : memref<8x6xi32, #tpu.memory_space<vmem>>, vector<8x1xi32>
    %43 = vector.broadcast %42 : vector<8x1xi32> to vector<8x256xi32>
    %44 = arith.cmpi eq, %43, %0 : vector<8x256xi32>
    %c5_16 = arith.constant 5 : index
    %45 = memref.load %arg1[%c5_16] : memref<6xf32, #tpu.memory_space<smem>>
    %cst_17 = arith.constant 0.000000e+00 : f32
    %46 = vector.broadcast %45 : f32 to vector<8x256xf32>
    %47 = vector.broadcast %cst_17 : f32 to vector<8x256xf32>
    %48 = arith.select %44, %46, %47 : vector<8x256xi1>, vector<8x256xf32>
    %49 = arith.addf %41, %48 : vector<8x256xf32>
    %50 = arith.truncf %49 : vector<8x256xf32> to vector<8x256xbf16>
    %c0_18 = arith.constant 0 : index
    %c0_19 = arith.constant 0 : index
    %51 = vector.load %arg2[%c0_18, %c0_19] : memref<256x128xbf16, #tpu.memory_space<vmem>>, vector<256x128xbf16>
    %cst_20 = arith.constant dense<0.000000e+00> : vector<8x128xf32>
    %52 = tpu.matmul %50, %51, %cst_20 {dimension_numbers = #tpu.dot_dimension_numbers<[1], [0], [0], [1], [0, 0, 1, 1], [], []>} : vector<8x256xbf16>, vector<256x128xbf16>, vector<8x128xf32> -> vector<8x128xf32>
    %53 = arith.truncf %52 : vector<8x128xf32> to vector<8x128xbf16>
    %c0_21 = arith.constant 0 : index
    %c0_22 = arith.constant 0 : index
    %54 = vector.load %arg3[%c0_21, %c0_22] : memref<128x256xbf16, #tpu.memory_space<vmem>>, vector<128x256xbf16>
    %cst_23 = arith.constant dense<0.000000e+00> : vector<8x256xf32>
    %55 = tpu.matmul %53, %54, %cst_23 {dimension_numbers = #tpu.dot_dimension_numbers<[1], [0], [0], [1], [0, 0, 1, 1], [], []>} : vector<8x128xbf16>, vector<128x256xbf16>, vector<8x256xf32> -> vector<8x256xf32>
    %c0_24 = arith.constant 0 : index
    %c0_25 = arith.constant 0 : index
    %56 = vector.load %arg4[%c0_24, %c0_25] : memref<8x256xf32, #tpu.memory_space<vmem>>, vector<8x256xf32>
    tpu.vector_store %arg4[%c0_24, %c0_25], %55 {strides = array<i32>} : memref<8x256xf32, #tpu.memory_space<vmem>>, vector<8x256xf32>,
    return
  }
}

</mosaic_0001>

<llo_original>
// kernel: tpu_custom_call.1
$region0: #{tpu_custom_call.1}
  #allocation0 [shape = 'u32[]', space=smem, size = 0x4, offset = 0x4, fixed_abs, tag = 'smem constant byte address 0x4 - core index']
  #allocation1 [shape = 'u32[144,128]{1,0:T(1,128)}', space=vmem, size = 0x12000, scoped, tag = 'internal scratch']
  %s0 = inlined_call_operand.hbm [shape: s32[8,6], index: 0, kind: input, shape index: {}]
  %s1 = inlined_call_operand.vmem [shape: f32[6], index: 1, kind: input, shape index: {}]
  %s2 = inlined_call_operand.hbm [shape: bf16[256,128], index: 2, kind: input, shape index: {}]
  %s3 = inlined_call_operand.hbm [shape: bf16[128,256], index: 3, kind: input, shape index: {}]
  %s4 = inlined_call_operand.hbm [shape: f32[8,256], index: 4, kind: output, shape index: {}]
  %s5 = sld [smem:[#allocation0]]
  $region42: #{tpu_custom_call.1} parent=0
    _
  %s7 = ssub.s32 1, %s5
  %s8 = scalar_select 0, %s7, %s5
  $region1: #{tpu_custom_call.1} parent=0
    #allocation2 [shape = 'u8[4096]{0}', space=vmem, size = 0x1000, scoped, tag = 'input window, operand 0, single buffered']
    #allocation3 [shape = 's32[1]{0}', space=sflag, size = 0x4, scoped, tag = 'scoped memory for tpu_custom_call.1']
    #allocation4 [shape = 's32[1]{0}', space=sflag, size = 0x4, scoped, tag = 'scoped memory for tpu_custom_call.1']
    #allocation5 [shape = 's32[1]{0}', space=sflag, size = 0x4, scoped, tag = 'scoped memory for tpu_custom_call.1']
    #allocation6 [shape = 'u8[512]{0}', space=smem, size = 0x200, scoped, tag = 'input window, operand 1, single buffered']
    #allocation7 [shape = 'u8[65536]{0}', space=vmem, size = 0x10000, scoped, tag = 'input window, operand 2, single buffered']
    #allocation8 [shape = 's32[1]{0}', space=sflag, size = 0x4, scoped, tag = 'scoped memory for tpu_custom_call.1']
    #allocation9 [shape = 'u8[65536]{0}', space=vmem, size = 0x10000, scoped, tag = 'input window, operand 3, single buffered']
    #allocation10 [shape = 'u8[8192]{0}', space=vmem, size = 0x2000, scoped, tag = 'output window, operand 0, single buffered']
    %9 = vsyncpa [#allocation3], 0
    %10 = vsyncpa [#allocation5], 0
    %11 = vsyncpa [#allocation8], 0
    %12 = vsyncpa [#allocation4], 0
    // Predicated region
    $region2: #{tpu_custom_call.1} parent=1 // pred_check
      _
    $region3: #{tpu_custom_call.1} parent=1 // pred_check_branch
      %14 = sbr.rel (0) target = $region5
    $region4: #{tpu_custom_call.1} parent=1 // pred_region
      %s16 = ssub.s32 128, 128
      %17 = vsyncadd [#allocation3], %s16
      %s19 = sshll.u32 [#allocation2], 4
      %s20 = int_to_ptr.vmem [resolvable:$true] %s19
      %22 = dma.hbm_to_vmem [thread:$0]  %s0, 128, %s20, [#allocation3]
    $region5: #{tpu_custom_call.1} parent=1 // pred_fallthru
      _
    // Predicated region
    $region6: #{tpu_custom_call.1} parent=1 // pred_check
      _
    $region7: #{tpu_custom_call.1} parent=1 // pred_check_branch
      %24 = sbr.rel (0) target = $region9
    $region8: #{tpu_custom_call.1} parent=1 // pred_region
      %s26 = ssub.s32 16, 16
      %27 = vsyncadd [#allocation5], %s26
      %s29 = sshll.u32 %s1, 4
      %s30 = int_to_ptr.vmem [resolvable:$true] %s29
      %32 = dma.vmem_to_smem %s30, 16, [#allocation6], [#allocation5]
    $region9: #{tpu_custom_call.1} parent=1 // pred_fallthru
      _
    // Predicated region
    $region10: #{tpu_custom_call.1} parent=1 // pred_check
      _
    $region11: #{tpu_custom_call.1} parent=1 // pred_check_branch
      %34 = sbr.rel (0) target = $region13
    $region12: #{tpu_custom_call.1} parent=1 // pred_region
      %s36 = ssub.s32 2048, 2048
      %37 = vsyncadd [#allocation8], %s36
      %s38 = sshll.u32 [#allocation7], 4
      %s39 = int_to_ptr.vmem [resolvable:$true] %s38
      %44 = dma.hbm_to_vmem [thread:$0]  %s2, 2048, %s39, [#allocation8], 64, 64, 4
    $region13: #{tpu_custom_call.1} parent=1 // pred_fallthru
      _
    // Predicated region
    $region14: #{tpu_custom_call.1} parent=1 // pred_check
      _
    $region15: #{tpu_custom_call.1} parent=1 // pred_check_branch
      %46 = sbr.rel (0) target = $region17
    $region16: #{tpu_custom_call.1} parent=1 // pred_region
      %s48 = ssub.s32 2048, 2048
      %49 = vsyncadd [#allocation8], %s48
      %s50 = sshll.u32 [#allocation9], 4
      %s51 = int_to_ptr.vmem [resolvable:$true] %s50
      %56 = dma.hbm_to_vmem [thread:$0]  %s3, 2048, %s51, [#allocation8], 128, 128, 8
    $region17: #{tpu_custom_call.1} parent=1 // pred_fallthru
      _
    // Predicated region
    $region18: #{tpu_custom_call.1} parent=1 // pred_check
      _
    $region19: #{tpu_custom_call.1} parent=1 // pred_check_branch
      %58 = sbr.rel (0) target = $region21
    $region20: #{tpu_custom_call.1} parent=1 // pred_region
      %59 = dma.done [#allocation3], 128
    $region21: #{tpu_custom_call.1} parent=1 // pred_fallthru
      _
    // Predicated region
    $region22: #{tpu_custom_call.1} parent=1 // pred_check
      _
    $region23: #{tpu_custom_call.1} parent=1 // pred_check_branch
      %61 = sbr.rel (0) target = $region25
    $region24: #{tpu_custom_call.1} parent=1 // pred_region
      %62 = dma.done [#allocation5], 16
    $region25: #{tpu_custom_call.1} parent=1 // pred_fallthru
      _
    // Predicated region
    $region26: #{tpu_custom_call.1} parent=1 // pred_check
      _
    $region27: #{tpu_custom_call.1} parent=1 // pred_check_branch
      %64 = sbr.rel (0) target = $region29
    $region28: #{tpu_custom_call.1} parent=1 // pred_region
      %65 = dma.done [#allocation8], 2048
    $region29: #{tpu_custom_call.1} parent=1 // pred_fallthru
      _
    // Predicated region
    $region30: #{tpu_custom_call.1} parent=1 // pred_check
      _
    $region31: #{tpu_custom_call.1} parent=1 // pred_check_branch
      %67 = sbr.rel (0) target = $region33
    $region32: #{tpu_custom_call.1} parent=1 // pred_region
      %68 = dma.done [#allocation8], 2048
    $region33: #{tpu_custom_call.1} parent=1 // pred_fallthru
      _
    %69 = sfence
    %v71 = vlaneseq
    %v72 = vand.u32 %v71, 127
    %v73 = vadd.s32 %v72, 128
    %v74 = vld [vmem:[#allocation2] sm:$0xff]
    %75 = vset.pattern.permute.xlu0 0
    %76 = vperm.xlu0 %75, %v74
    %v77 = vpop.permute.xlu0 %76
    %vm78 = vcmp.eq.s32.totalorder %v77, %v72
    %vm79 = vcmp.eq.s32.totalorder %v77, %v73
    %s80 = sld [smem:[#allocation6]]
    %v81 = vstv %s80
    %v82 = vsel %vm78, %v81, 0.0
    %v83 = vsel %vm79, %v81, 0.0
    %v84 = vadd.f32 %v82, 0.0
    %v85 = vadd.f32 %v83, 0.0
    %86 = vset.pattern.permute.xlu0 1
    %87 = vperm.xlu0 %86, %v74
    %v88 = vpop.permute.xlu0 %87
    %vm89 = vcmp.eq.s32.totalorder %v88, %v72
    %vm90 = vcmp.eq.s32.totalorder %v88, %v73
    %s91 = sld [smem:[#allocation6 + $0x1]]
    %v92 = vstv %s91
    %v93 = vsel %vm89, %v92, 0.0
    %v94 = vsel %vm90, %v92, 0.0
    %v95 = vadd.f32 %v84, %v93
    %v96 = vadd.f32 %v85, %v94
    %97 = vset.pattern.permute.xlu0 2
    %98 = vperm.xlu0 %97, %v74
    %v99 = vpop.permute.xlu0 %98
    %vm100 = vcmp.eq.s32.totalorder %v99, %v72
    %vm101 = vcmp.eq.s32.totalorder %v99, %v73
    %s102 = sld [smem:[#allocation6 + $0x2]]
    %v103 = vstv %s102
    %v104 = vsel %vm100, %v103, 0.0
    %v105 = vsel %vm101, %v103, 0.0
    %v106 = vadd.f32 %v95, %v104
    %v107 = vadd.f32 %v96, %v105
    %108 = vset.pattern.permute.xlu0 3
    %109 = vperm.xlu0 %108, %v74
    %v110 = vpop.permute.xlu0 %109
    %vm111 = vcmp.eq.s32.totalorder %v110, %v72
    %vm112 = vcmp.eq.s32.totalorder %v110, %v73
    %s113 = sld [smem:[#allocation6 + $0x3]]
    %v114 = vstv %s113
    %v115 = vsel %vm111, %v114, 0.0
    %v116 = vsel %vm112, %v114, 0.0
    %v117 = vadd.f32 %v106, %v115
    %v118 = vadd.f32 %v107, %v116
    %119 = vset.pattern.permute.xlu0 4
    %120 = vperm.xlu0 %119, %v74
    %v121 = vpop.permute.xlu0 %120
    %vm122 = vcmp.eq.s32.totalorder %v121, %v72
    %vm123 = vcmp.eq.s32.totalorder %v121, %v73
    %s124 = sld [smem:[#allocation6 + $0x4]]
    %v125 = vstv %s124
    %v126 = vsel %vm122, %v125, 0.0
    %v127 = vsel %vm123, %v125, 0.0
    %v128 = vadd.f32 %v117, %v126
    %v129 = vadd.f32 %v118, %v127
    %130 = vset.pattern.permute.xlu0 5
    %131 = vperm.xlu0 %130, %v74
    %v132 = vpop.permute.xlu0 %131
    %vm133 = vcmp.eq.s32.totalorder %v132, %v72
    %vm134 = vcmp.eq.s32.totalorder %v132, %v73
    %s135 = sld [smem:[#allocation6 + $0x5]]
    %v136 = vstv %s135
    %v137 = vsel %vm133, %v136, 0.0
    %v138 = vsel %vm134, %v136, 0.0
    %v139 = vadd.f32 %v128, %v137
    %v140 = vadd.f32 %v129, %v138
    %v141 = vpack.c.bf16 %v139, %v139
    %v142 = vpack.c.bf16 %v140, %v140
    %v143 = vld [vmem:[#allocation7] sm:$0xf]
    %v144 = vld [vmem:[#allocation7 + $0x4] sm:$0xf]
    %v145 = vld [vmem:[#allocation7 + $0x8] sm:$0xf]
    %v146 = vld [vmem:[#allocation7 + $0xc] sm:$0xf]
    %v147 = vld [vmem:[#allocation7 + $0x10] sm:$0xf]
    %v148 = vld [vmem:[#allocation7 + $0x14] sm:$0xf]
    %v149 = vld [vmem:[#allocation7 + $0x18] sm:$0xf]
    %v150 = vld [vmem:[#allocation7 + $0x1c] sm:$0xf]
    %v151 = vld [vmem:[#allocation7 + $0x20] sm:$0xf]
    %v152 = vld [vmem:[#allocation7 + $0x24] sm:$0xf]
    %v153 = vld [vmem:[#allocation7 + $0x28] sm:$0xf]
    %v154 = vld [vmem:[#allocation7 + $0x2c] sm:$0xf]
    %v155 = vld [vmem:[#allocation7 + $0x30] sm:$0xf]
    %v156 = vld [vmem:[#allocation7 + $0x34] sm:$0xf]
    %v157 = vld [vmem:[#allocation7 + $0x38] sm:$0xf]
    %v158 = vld [vmem:[#allocation7 + $0x3c] sm:$0xf]
    %v159 = vld [vmem:[#allocation7 + $0x40] sm:$0xf]
    %v160 = vld [vmem:[#allocation7 + $0x44] sm:$0xf]
    %v161 = vld [vmem:[#allocation7 + $0x48] sm:$0xf]
    %v162 = vld [vmem:[#allocation7 + $0x4c] sm:$0xf]
    %v163 = vld [vmem:[#allocation7 + $0x50] sm:$0xf]
    %v164 = vld [vmem:[#allocation7 + $0x54] sm:$0xf]
    %v165 = vld [vmem:[#allocation7 + $0x58] sm:$0xf]
    %v166 = vld [vmem:[#allocation7 + $0x5c] sm:$0xf]
    %v167 = vld [vmem:[#allocation7 + $0x60] sm:$0xf]
    %v168 = vld [vmem:[#allocation7 + $0x64] sm:$0xf]
    %v169 = vld [vmem:[#allocation7 + $0x68] sm:$0xf]
    %v170 = vld [vmem:[#allocation7 + $0x6c] sm:$0xf]
    %v171 = vld [vmem:[#allocation7 + $0x70] sm:$0xf]
    %v172 = vld [vmem:[#allocation7 + $0x74] sm:$0xf]
    %v173 = vld [vmem:[#allocation7 + $0x78] sm:$0xf]
    %v174 = vld [vmem:[#allocation7 + $0x7c] sm:$0xf]
    %v207 = vunpack.c.l.b16 %v143
    %v208 = vunpack.c.l.b16 %v144
    %v209 = vunpack.c.l.b16 %v145
    %v210 = vunpack.c.l.b16 %v146
    %v211 = vunpack.c.l.b16 %v147
    %v212 = vunpack.c.l.b16 %v148
    %v213 = vunpack.c.l.b16 %v149
    %v214 = vunpack.c.l.b16 %v150
    %v215 = vunpack.c.l.b16 %v151
    %v216 = vunpack.c.l.b16 %v152
    %v217 = vunpack.c.l.b16 %v153
    %v218 = vunpack.c.l.b16 %v154
    %v219 = vunpack.c.l.b16 %v155
    %v220 = vunpack.c.l.b16 %v156
    %v221 = vunpack.c.l.b16 %v157
    %v222 = vunpack.c.l.b16 %v158
    %v223 = vunpack.c.l.b16 %v159
    %v224 = vunpack.c.l.b16 %v160
    %v225 = vunpack.c.l.b16 %v161
    %v226 = vunpack.c.l.b16 %v162
    %v227 = vunpack.c.l.b16 %v163
    %v228 = vunpack.c.l.b16 %v164
    %v229 = vunpack.c.l.b16 %v165
    %v230 = vunpack.c.l.b16 %v166
    %v231 = vunpack.c.l.b16 %v167
    %v232 = vunpack.c.l.b16 %v168
    %v233 = vunpack.c.l.b16 %v169
    %v234 = vunpack.c.l.b16 %v170
    %v235 = vunpack.c.l.b16 %v171
    %v236 = vunpack.c.l.b16 %v172
    %v237 = vunpack.c.l.b16 %v173
    %v238 = vunpack.c.l.b16 %v174
    %v239 = vpack.c.b16 %v208, %v207
    %v240 = vpack.c.b16 %v210, %v209
    %v241 = vpack.c.b16 %v212, %v211
    %v242 = vpack.c.b16 %v214, %v213
    %v243 = vpack.c.b16 %v216, %v215
    %v244 = vpack.c.b16 %v218, %v217
    %v245 = vpack.c.b16 %v220, %v219
    %v246 = vpack.c.b16 %v222, %v221
    %v247 = vpack.c.b16 %v224, %v223
    %v248 = vpack.c.b16 %v226, %v225
    %v249 = vpack.c.b16 %v228, %v227
    %v250 = vpack.c.b16 %v230, %v229
    %v251 = vpack.c.b16 %v232, %v231
    %v252 = vpack.c.b16 %v234, %v233
    %v253 = vpack.c.b16 %v236, %v235
    %v254 = vpack.c.b16 %v238, %v237
    %271 = vmatprep.subr.bf16.mxu0 0
    %272 = vmatpush1.bf16.msra.mxu0 %v239
    %273 = vmatprep.subr.bf16.mxu0 0
    %274 = vmatpush1.bf16.msra.mxu0 %v240
    %275 = vmatprep.subr.bf16.mxu0 0
    %276 = vmatpush1.bf16.msra.mxu0 %v241
    %277 = vmatprep.subr.bf16.mxu0 0
    %278 = vmatpush1.bf16.msra.mxu0 %v242
    %279 = vmatprep.subr.bf16.mxu0 0
    %280 = vmatpush1.bf16.msra.mxu0 %v243
    %281 = vmatprep.subr.bf16.mxu0 0
    %282 = vmatpush1.bf16.msra.mxu0 %v244
    %283 = vmatprep.subr.bf16.mxu0 0
    %284 = vmatpush1.bf16.msra.mxu0 %v245
    %285 = vmatprep.subr.bf16.mxu0 0
    %286 = vmatpush1.bf16.msra.mxu0 %v246
    %287 = vmatprep.subr.bf16.mxu0 0
    %288 = vmatpush1.bf16.msra.mxu0 %v247
    %289 = vmatprep.subr.bf16.mxu0 0
    %290 = vmatpush1.bf16.msra.mxu0 %v248
    %291 = vmatprep.subr.bf16.mxu0 0
    %292 = vmatpush1.bf16.msra.mxu0 %v249
    %293 = vmatprep.subr.bf16.mxu0 0
    %294 = vmatpush1.bf16.msra.mxu0 %v250
    %295 = vmatprep.subr.bf16.mxu0 0
    %296 = vmatpush1.bf16.msra.mxu0 %v251
    %297 = vmatprep.subr.bf16.mxu0 0
    %298 = vmatpush1.bf16.msra.mxu0 %v252
    %299 = vmatprep.subr.bf16.mxu0 0
    %300 = vmatpush1.bf16.msra.mxu0 %v253
    %301 = vmatprep.subr.bf16.mxu0 0
    %302 = vmatpush1.bf16.msra.mxu0 %v254
    %303 = vmatprep.mubr.bf16.mxu0 %v142
    %304 = vmatmul.mubr.bf16.gmra.mrb[0].mxu0 %v141
    %v305 = vpop.f32.mrb[0].mxu0
    %v306 = vadd.f32 0.0, %v305
    %v307 = vpop.f32.mrb[0].mxu0
    %v308 = vpop.f32.mrb[0].mxu0
    %v309 = vpop.f32.mrb[0].mxu0
    %310 = vdwg.mxu0
    %v311 = vpack.c.bf16 %v306, %v306
    %v312 = vld [vmem:[#allocation9] sm:$0xff]
    %v313 = vld [vmem:[#allocation9 + $0x8] sm:$0xff]
    %v314 = vld [vmem:[#allocation9 + $0x10] sm:$0xff]
    %v315 = vld [vmem:[#allocation9 + $0x18] sm:$0xff]
    %v316 = vld [vmem:[#allocation9 + $0x20] sm:$0xff]
    %v317 = vld [vmem:[#allocation9 + $0x28] sm:$0xff]
    %v318 = vld [vmem:[#allocation9 + $0x30] sm:$0xff]
    %v319 = vld [vmem:[#allocation9 + $0x38] sm:$0xff]
    %v320 = vld [vmem:[#allocation9 + $0x40] sm:$0xff]
    %v321 = vld [vmem:[#allocation9 + $0x48] sm:$0xff]
    %v322 = vld [vmem:[#allocation9 + $0x50] sm:$0xff]
    %v323 = vld [vmem:[#allocation9 + $0x58] sm:$0xff]
    %v324 = vld [vmem:[#allocation9 + $0x60] sm:$0xff]
    %v325 = vld [vmem:[#allocation9 + $0x68] sm:$0xff]
    %v326 = vld [vmem:[#allocation9 + $0x70] sm:$0xff]
    %v327 = vld [vmem:[#allocation9 + $0x78] sm:$0xff]
    %v344 = vunpack.c.l.b16 %v312
    %v345 = vunpack.c.h.b16 %v312
    %v346 = vunpack.c.l.b16 %v313
    %v347 = vunpack.c.h.b16 %v313
    %v348 = vunpack.c.l.b16 %v314
    %v349 = vunpack.c.h.b16 %v314
    %v350 = vunpack.c.l.b16 %v315
    %v351 = vunpack.c.h.b16 %v315
    %v352 = vunpack.c.l.b16 %v316
    %v353 = vunpack.c.h.b16 %v316
    %v354 = vunpack.c.l.b16 %v317
    %v355 = vunpack.c.h.b16 %v317
    %v356 = vunpack.c.l.b16 %v318
    %v357 = vunpack.c.h.b16 %v318
    %v358 = vunpack.c.l.b16 %v319
    %v359 = vunpack.c.h.b16 %v319
    %v360 = vunpack.c.l.b16 %v320
    %v361 = vunpack.c.h.b16 %v320
    %v362 = vunpack.c.l.b16 %v321
    %v363 = vunpack.c.h.b16 %v321
    %v364 = vunpack.c.l.b16 %v322
    %v365 = vunpack.c.h.b16 %v322
    %v366 = vunpack.c.l.b16 %v323
    %v367 = vunpack.c.h.b16 %v323
    %v368 = vunpack.c.l.b16 %v324
    %v369 = vunpack.c.h.b16 %v324
    %v370 = vunpack.c.l.b16 %v325
    %v371 = vunpack.c.h.b16 %v325
    %v372 = vunpack.c.l.b16 %v326
    %v373 = vunpack.c.h.b16 %v326
    %v374 = vunpack.c.l.b16 %v327
    %v375 = vunpack.c.h.b16 %v327
    %v376 = vpack.c.b16 %v346, %v344
    %v377 = vpack.c.b16 %v347, %v345
    %v378 = vpack.c.b16 %v350, %v348
    %v379 = vpack.c.b16 %v351, %v349
    %v380 = vpack.c.b16 %v354, %v352
    %v381 = vpack.c.b16 %v355, %v353
    %v382 = vpack.c.b16 %v358, %v356
    %v383 = vpack.c.b16 %v359, %v357
    %v384 = vpack.c.b16 %v362, %v360
    %v385 = vpack.c.b16 %v363, %v361
    %v386 = vpack.c.b16 %v366, %v364
    %v387 = vpack.c.b16 %v367, %v365
    %v388 = vpack.c.b16 %v370, %v368
    %v389 = vpack.c.b16 %v371, %v369
    %v390 = vpack.c.b16 %v374, %v372
    %v391 = vpack.c.b16 %v375, %v373
    %408 = vmatprep.subr.bf16.mxu0 %v377
    %409 = vmatpush1.bf16.msra.mxu0 %v376
    %410 = vmatprep.subr.bf16.mxu0 %v379
    %411 = vmatpush1.bf16.msra.mxu0 %v378
    %412 = vmatprep.subr.bf16.mxu0 %v381
    %413 = vmatpush1.bf16.msra.mxu0 %v380
    %414 = vmatprep.subr.bf16.mxu0 %v383
    %415 = vmatpush1.bf16.msra.mxu0 %v382
    %416 = vmatprep.subr.bf16.mxu0 %v385
    %417 = vmatpush1.bf16.msra.mxu0 %v384
    %418 = vmatprep.subr.bf16.mxu0 %v387
    %419 = vmatpush1.bf16.msra.mxu0 %v386
    %420 = vmatprep.subr.bf16.mxu0 %v389
    %421 = vmatpush1.bf16.msra.mxu0 %v388
    %422 = vmatprep.subr.bf16.mxu0 %v391
    %423 = vmatpush1.bf16.msra.mxu0 %v390
    %424 = vmatprep.subr.bf16.mxu0 0
    %425 = vmatpush1.bf16.msra.mxu0 0
    %426 = vmatprep.subr.bf16.mxu0 0
    %427 = vmatpush1.bf16.msra.mxu0 0
    %428 = vmatprep.subr.bf16.mxu0 0
    %429 = vmatpush1.bf16.msra.mxu0 0
    %430 = vmatprep.subr.bf16.mxu0 0
    %431 = vmatpush1.bf16.msra.mxu0 0
    %432 = vmatprep.subr.bf16.mxu0 0
    %433 = vmatpush1.bf16.msra.mxu0 0
    %434 = vmatprep.subr.bf16.mxu0 0
    %435 = vmatpush1.bf16.msra.mxu0 0
    %436 = vmatprep.subr.bf16.mxu0 0
    %437 = vmatpush1.bf16.msra.mxu0 0
    %438 = vmatprep.subr.bf16.mxu0 0
    %439 = vmatpush1.bf16.msra.mxu0 0
    %440 = vmatprep.mubr.bf16.mxu0 0
    %441 = vmatmul.mubr.bf16.gmra.mrb[0].mxu0 %v311
    %v442 = vpop.f32.mrb[0].mxu0
    %v443 = vadd.f32 0.0, %v442
    %v444 = vpop.f32.mrb[0].mxu0
    %v445 = vadd.f32 0.0, %v444
    %v446 = vpop.f32.mrb[0].mxu0
    %v447 = vpop.f32.mrb[0].mxu0
    %448 = vdwg.mxu0
    %449 = vst [vmem:[#allocation10] sm:$0xff] %v443
    %450 = vst [vmem:[#allocation10 + $0x8] sm:$0xff] %v445
    // Predicated region
    $region34: #{tpu_custom_call.1} parent=1 // pred_check
      _
    $region35: #{tpu_custom_call.1} parent=1 // pred_check_branch
      %452 = sbr.rel (0) target = $region37
    $region36: #{tpu_custom_call.1} parent=1 // pred_region
      %s454 = ssub.s32 256, 256
      %455 = vsyncadd [#allocation4], %s454
      %s457 = sshll.u32 [#allocation10], 4
      %s458 = int_to_ptr.vmem [resolvable:$true] %s457
      %460 = dma.vmem_to_hbm [thread:$0]  %s458, 256, %s4, [#allocation4]
    $region37: #{tpu_custom_call.1} parent=1 // pred_fallthru
      _
    // Predicated region
    $region38: #{tpu_custom_call.1} parent=1 // pred_check
      _
    $region39: #{tpu_custom_call.1} parent=1 // pred_check_branch
      %462 = sbr.rel (0) target = $region41
    $region40: #{tpu_custom_call.1} parent=1 // pred_region
      %463 = dma.done [#allocation4], 256
    $region41: #{tpu_custom_call.1} parent=1 // pred_fallthru
      _
    %464 = vsyncpa [#allocation3], 1
    %465 = vsyncpa [#allocation8], 1
    %466 = vsyncpa [#allocation4], 1
    %467 = vsyncpa [#allocation5], 1

</llo_original>
